<compile_context>
chip_gen: v7x
topology: tpu7x:2x2x1
jax: 0.10.0
libtpu: 0.0.40
codegen_flags: <defaults>
</compile_context>

<pallas_src>
import functools

import jax
import jax.numpy as jnp
from jax import lax
from jax.experimental import pallas as pl
from jax.experimental.pallas import tpu as pltpu

EPS = 1e-5            # nn.BatchNorm2d default eps
LANE = 128            # TPU lane width
_VMEM_LIMIT = 32 * 1024 * 1024   # safe on v5e/v6e/v7x; keeps double-buffering alive


# ----------------------------------------------------------------------------
# small helpers
# ----------------------------------------------------------------------------
def _round_up(x, m):
    return (x + m - 1) // m * m


def _pick_block_m(m_rows, requested):
    bm = min(requested, _round_up(m_rows, 16))
    return _round_up(bm, 16)


def _pad_rows(a, mp):
    return a if a.shape[0] == mp else jnp.pad(a, ((0, mp - a.shape[0]), (0, 0)))


def _pad_c(v, cp):
    return jnp.zeros((cp,), jnp.float32).at[: v.shape[0]].set(v.astype(jnp.float32))


def _bn_affine(sums, sumsq, count, gamma, beta):
    """Fold training-mode batch stats + (gamma, beta) into scale/shift."""
    mean = sums / count
    var = jnp.maximum(sumsq / count - mean * mean, 0.0)   # clamp cancellation
    inv = lax.rsqrt(var + EPS)
    scale = gamma * inv
    shift = beta - mean * scale
    return scale, shift


# ----------------------------------------------------------------------------
# Pallas kernels
# ----------------------------------------------------------------------------
def _matmul_stats_kernel(p_ref, w_ref, o_ref, stats_ref):
    """One M-tile of an im2col conv matmul + per-tile BN partial statistics."""
    h = jnp.dot(p_ref[...], w_ref[...], preferred_element_type=jnp.float32)
    o_ref[...] = h
    c = h.shape[1]
    s = jnp.sum(h, axis=0, keepdims=True)           # (1, C)
    sq = jnp.sum(h * h, axis=0, keepdims=True)      # (1, C)
    # rows 0/1 = sum / sum-of-squares, rows 2..7 = zero padding (aligned block)
    stats_ref[...] = jnp.concatenate([s, sq, jnp.zeros((6, c), jnp.float32)], axis=0)


def _bn_add_relu_fused_kernel(h_ref, scale_ref, shift_ref, o_ref, *, cp):
    """Downsample path: h holds [main | shortcut] channels (2*cp lanes)."""
    y = h_ref[...] * scale_ref[...] + shift_ref[...]
    o_ref[...] = jnp.maximum(y[:, :cp] + y[:, cp:], 0.0)


def _bn_add_relu_identity_kernel(h_ref, xs_ref, sm_ref, tm_ref, ss_ref, ts_ref, o_ref):
    """Identity path: BN2(main) + BN_s(x) + ReLU, all elementwise per tile."""
    main = h_ref[...] * sm_ref[...] + tm_ref[...]
    short = xs_ref[...] * ss_ref[...] + ts_ref[...]
    o_ref[...] = jnp.maximum(main + short, 0.0)


# ----------------------------------------------------------------------------
# pallas_call wrappers (grid tiled over M = pixel rows, "parallel" semantics)
# ----------------------------------------------------------------------------
def _conv_matmul_with_stats(patches, weights, bm):
    """patches: (Mp, K) already row-padded to a multiple of bm; weights: (K, Cpad)."""
    mp, k = patches.shape
    n_out = weights.shape[1]
    nt = mp // bm
    flops = 2 * mp * k * n_out
    bytes_accessed = (patches.size * patches.dtype.itemsize
                      + weights.size * weights.dtype.itemsize
                      + mp * n_out * 4 + nt * 8 * n_out * 4)
    out, stats = pl.pallas_call(
        _matmul_stats_kernel,
        grid=(nt,),
        in_specs=[
            pl.BlockSpec((bm, k), lambda i: (i, 0)),
            pl.BlockSpec((k, n_out), lambda i: (0, 0)),      # weights resident
        ],
        out_specs=(
            pl.BlockSpec((bm, n_out), lambda i: (i, 0)),     # lane-dense output
            pl.BlockSpec((8, n_out), lambda i: (i, 0)),      # per-tile partial stats
        ),
        out_shape=(
            jax.ShapeDtypeStruct((mp, n_out), jnp.float32),
            jax.ShapeDtypeStruct((nt * 8, n_out), jnp.float32),
        ),
        compiler_params=pltpu.CompilerParams(
            dimension_semantics=("parallel",),
            vmem_limit_bytes=_VMEM_LIMIT),
        cost_estimate=pl.CostEstimate(flops=flops, transcendentals=0,
                                      bytes_accessed=bytes_accessed),
    )(patches, weights)
    stats = stats.reshape(nt, 8, n_out)
    sums = jnp.sum(stats[:, 0, :], axis=0)
    sumsq = jnp.sum(stats[:, 1, :], axis=0)
    return out, sums, sumsq


def _bn_add_relu_fused(h2s, scale, shift, cp, bm):
    mp, two_cp = h2s.shape
    nt = mp // bm
    return pl.pallas_call(
        functools.partial(_bn_add_relu_fused_kernel, cp=cp),
        grid=(nt,),
        in_specs=[
            pl.BlockSpec((bm, two_cp), lambda i: (i, 0)),
            pl.BlockSpec((1, two_cp), lambda i: (0, 0)),
            pl.BlockSpec((1, two_cp), lambda i: (0, 0)),
        ],
        out_specs=pl.BlockSpec((bm, cp), lambda i: (i, 0)),
        out_shape=jax.ShapeDtypeStruct((mp, cp), jnp.float32),
        compiler_params=pltpu.CompilerParams(
            dimension_semantics=("parallel",),
            vmem_limit_bytes=_VMEM_LIMIT),
        cost_estimate=pl.CostEstimate(
            flops=4 * mp * two_cp, transcendentals=0,
            bytes_accessed=(mp * two_cp + mp * cp + 2 * two_cp) * 4),
    )(h2s, scale.reshape(1, two_cp), shift.reshape(1, two_cp))


def _bn_add_relu_identity(h2, xs, scale_m, shift_m, scale_s, shift_s, bm):
    mp, cp = h2.shape
    nt = mp // bm
    row = lambda v: v.reshape(1, cp)
    return pl.pallas_call(
        _bn_add_relu_identity_kernel,
        grid=(nt,),
        in_specs=[
            pl.BlockSpec((bm, cp), lambda i: (i, 0)),
            pl.BlockSpec((bm, cp), lambda i: (i, 0)),
            pl.BlockSpec((1, cp), lambda i: (0, 0)),
            pl.BlockSpec((1, cp), lambda i: (0, 0)),
            pl.BlockSpec((1, cp), lambda i: (0, 0)),
            pl.BlockSpec((1, cp), lambda i: (0, 0)),
        ],
        out_specs=pl.BlockSpec((bm, cp), lambda i: (i, 0)),
        out_shape=jax.ShapeDtypeStruct((mp, cp), jnp.float32),
        compiler_params=pltpu.CompilerParams(
            dimension_semantics=("parallel",),
            vmem_limit_bytes=_VMEM_LIMIT),
        cost_estimate=pl.CostEstimate(
            flops=5 * mp * cp, transcendentals=0,
            bytes_accessed=3 * mp * cp * 4),
    )(h2, xs, row(scale_m), row(shift_m), row(scale_s), row(shift_s))


# ----------------------------------------------------------------------------
# Plain-JAX glue: im2col (data rearrangement only, no FLOPs)
# ----------------------------------------------------------------------------
def _im2col(x, ksize, stride, pad):
    """x: (N, H, W, C) -> patches (N*Ho*Wo, ksize*ksize*C)."""
    n, h, w, c = x.shape
    xp = jnp.pad(x, ((0, 0), (pad, pad), (pad, pad), (0, 0)))
    ho = (h + 2 * pad - ksize) // stride + 1
    wo = (w + 2 * pad - ksize) // stride + 1
    cols = []
    for kh in range(ksize):
        for kw in range(ksize):
            sl = xp[:, kh:kh + stride * ho:stride, kw:kw + stride * wo:stride, :]
            cols.append(sl.reshape(n * ho * wo, c))
    return jnp.concatenate(cols, axis=1), (n, ho, wo)


# ----------------------------------------------------------------------------
# Full residualBlockShort forward
# ----------------------------------------------------------------------------
def residual_block_short(x, params, *, stride=1, downsample=False,
                         block_m=512, use_bf16=False):
    """x: (N, H, W, Cin) float32 NHWC.  Returns (N, Ho, Wo, Cout) float32.

    use_bf16: cast MXU matmul inputs to bf16 (f32 accumulation + f32 BN epilogue).
    """
    n, h, w, cin = x.shape
    w1 = params["w1"]                               # (3, 3, Cin, Cout) HWIO
    cout = w1.shape[-1]
    cp = _round_up(cout, LANE)                      # lane-dense channel padding
    mm_dtype = jnp.bfloat16 if use_bf16 else jnp.float32

    # ---- stage 1: conv1 (3x3, stride) + per-tile batch statistics -----------
    p1, (_, ho, wo) = _im2col(x, 3, stride, 1)      # (M, 9*Cin)
    m_rows = n * ho * wo
    bm = _pick_block_m(m_rows, block_m)
    mp = _round_up(m_rows, bm)

    w1m = jnp.zeros((9 * cin, cp), jnp.float32).at[:, :cout].set(
        w1.reshape(9 * cin, cout))
    h1, s1, q1 = _conv_matmul_with_stats(
        _pad_rows(p1, mp).astype(mm_dtype), w1m.astype(mm_dtype), bm)

    # BN1 + ReLU: stats come from the kernel; applying them is cheap XLA glue.
    scale1, shift1 = _bn_affine(s1[:cout], q1[:cout], m_rows,
                                params["g1"], params["b1"])
    y1 = jnp.maximum(h1[:m_rows, :cout] * scale1 + shift1, 0.0)
    y1 = y1.reshape(n, ho, wo, cout)

    # ---- stage 2: conv2 (3x3, stride 1) [+ fused 1x1 shortcut conv] ----------
    p2, _ = _im2col(y1, 3, 1, 1)                    # (M, 9*Cout)

    if downsample:
        xs, _ = _im2col(x, 1, stride, 0)            # (M, Cin), strided 1x1 samples
        kcat = 9 * cout + cin
        # Block-diagonal weights -> ONE matmul produces [main | shortcut] lanes.
        wcat = jnp.zeros((kcat, 2 * cp), jnp.float32)
        wcat = wcat.at[:9 * cout, :cout].set(params["w2"].reshape(9 * cout, cout))
        wcat = wcat.at[9 * cout:, cp:cp + cout].set(params["ws"].reshape(cin, cout))
        pcat = _pad_rows(jnp.concatenate([p2, xs], axis=1), mp)

        h2s, s2, q2 = _conv_matmul_with_stats(
            pcat.astype(mm_dtype), wcat.astype(mm_dtype), bm)

        gam = jnp.concatenate([_pad_c(params["g2"], cp), _pad_c(params["gs"], cp)])
        bet = jnp.concatenate([_pad_c(params["b2"], cp), _pad_c(params["bs"], cp)])
        scale, shift = _bn_affine(s2, q2, m_rows, gam, bet)

        out = _bn_add_relu_fused(h2s, scale, shift, cp, bm)
    else:
        # Identity shortcut (requires stride == 1 and Cin == Cout, as in PyTorch).
        w2m = jnp.zeros((9 * cout, cp), jnp.float32).at[:, :cout].set(
            params["w2"].reshape(9 * cout, cout))
        h2, s2, q2 = _conv_matmul_with_stats(
            _pad_rows(p2, mp).astype(mm_dtype), w2m.astype(mm_dtype), bm)
        scale2, shift2 = _bn_affine(s2, q2, m_rows,
                                    _pad_c(params["g2"], cp),
                                    _pad_c(params["b2"], cp))

        # Shortcut BN statistics of x itself: exact, O(M*C) XLA reduction.
        xm = jnp.mean(x, axis=(0, 1, 2))
        xv = jnp.mean((x - xm) ** 2, axis=(0, 1, 2))
        inv_s = lax.rsqrt(xv + EPS)
        scale_s = _pad_c(params["gs"] * inv_s, cp)
        shift_s = _pad_c(params["bs"] - params["gs"] * inv_s * xm, cp)

        xs = jnp.zeros((mp, cp), jnp.float32).at[:m_rows, :cin].set(
            x.reshape(m_rows, cin))
        out = _bn_add_relu_identity(h2, xs, scale2, shift2, scale_s, shift_s, bm)

    return out[:m_rows, :cout].reshape(n, ho, wo, cout)


# ----------------------------------------------------------------------------
# Pure-JAX reference (for correctness check)
# ----------------------------------------------------------------------------
def _reference(x, params, *, stride=1, downsample=False, cast_bf16=False):
    prep = (lambda a: a.astype(jnp.bfloat16)) if cast_bf16 else (lambda a: a)

    def conv(y, wt, s, pad):
        return lax.conv_general_dilated(
            prep(y), prep(wt), (s, s), [(pad, pad), (pad, pad)],
            dimension_numbers=("NHWC", "HWIO", "NHWC"),
            preferred_element_type=jnp.float32)

    def bn(y, gamma, beta):
        mean = jnp.mean(y, axis=(0, 1, 2), keepdims=True)
        var = jnp.mean((y - mean) ** 2, axis=(0, 1, 2), keepdims=True)
        return (y - mean) * lax.rsqrt(var + EPS) * gamma + beta

    hh = conv(x, params["w1"], stride, 1)
    hh = jnp.maximum(bn(hh, params["g1"], params["b1"]), 0.0)
    main = bn(conv(hh, params["w2"], 1, 1), params["g2"], params["b2"])
    if downsample:
        short = bn(conv(x, params["ws"], stride, 0), params["gs"], params["bs"])
    else:
        short = bn(x, params["gs"], params["bs"])
    return jnp.maximum(main + short, 0.0)


# ----------------------------------------------------------------------------
if __name__ == "__main__":
    key = jax.random.PRNGKey(0)
    keys = jax.random.split(key, 10)

    N, H, W, C = 2, 16, 16, 4            # in_channel == out_channel == 4
    x = jax.random.normal(keys[0], (N, H, W, C), jnp.float32)

    params = {
        "w1": jax.random.normal(keys[1], (3, 3, C, C), jnp.float32) * (2.0 / (9 * C)) ** 0.5,
        "w2": jax.random.normal(keys[2], (3, 3, C, C), jnp.float32) * (2.0 / (9 * C)) ** 0.5,
        "ws": jax.random.normal(keys[3], (1, 1, C, C), jnp.float32) * (2.0 / C) ** 0.5,
        "g1": 1.0 + 0.1 * jax.random.normal(keys[4], (C,), jnp.float32),
        "b1": 0.1 * jax.random.normal(keys[5], (C,), jnp.float32),
        "g2": 1.0 + 0.1 * jax.random.normal(keys[6], (C,), jnp.float32),
        "b2": 0.1 * jax.random.normal(keys[7], (C,), jnp.float32),
        "gs": 1.0 + 0.1 * jax.random.normal(keys[8], (C,), jnp.float32),
        "bs": 0.1 * jax.random.normal(keys[9], (C,), jnp.float32),
    }

    # Identity shortcut path (stride=1); block_m=128 -> 4-program grid exercises tiling.
    out = residual_block_short(x, params, stride=1, downsample=False, block_m=128)
    out = jax.block_until_ready(out)
    ref = _reference(x, params, stride=1, downsample=False)
    assert out.shape == (N, H, W, C), out.shape
    assert jnp.allclose(out, ref, atol=2e-3, rtol=2e-3), "mismatch (identity path)"

    # Downsample path (stride=2, fused conv2 + 1x1-shortcut block-diag matmul).
    out_ds = residual_block_short(x, params, stride=2, downsample=True, block_m=128)
    out_ds = jax.block_until_ready(out_ds)
    ref_ds = _reference(x, params, stride=2, downsample=True)
    assert out_ds.shape == (N, H // 2, W // 2, C), out_ds.shape
    assert jnp.allclose(out_ds, ref_ds, atol=2e-3, rtol=2e-3), "mismatch (downsample path)"

    # bf16 MXU-input mode, checked against a bf16-input-matched XLA reference.
    out_bf = residual_block_short(x, params, stride=2, downsample=True,
                                  block_m=128, use_bf16=True)
    out_bf = jax.block_until_ready(out_bf)
    ref_bf = _reference(x, params, stride=2, downsample=True, cast_bf16=True)
    assert jnp.allclose(out_bf, ref_bf, atol=5e-3, rtol=5e-3), "mismatch (bf16 path)"

    print("KERNEL_OK")
</pallas_src>

<mosaic_0001>
module attributes {stable_mosaic.version = 11 : i64} {
  func.func @_matmul_stats_kernel(%arg0: i32, %arg1: memref<128x36xf32, #tpu.memory_space<vmem>>, %arg2: memref<36x128xf32, #tpu.memory_space<vmem>>, %arg3: memref<128x128xf32, #tpu.memory_space<vmem>>, %arg4: memref<8x128xf32, #tpu.memory_space<vmem>>) attributes {dimension_semantics = [#tpu.dimension_semantics<parallel>], iteration_bounds = array<i64: 4>, scalar_prefetch = 0 : i64, scratch_operands = 0 : i64, tpu.core_type = #tpu.core_type<tc>, window_params = [{transform_indices = @transform_0, window_bounds = array<i64: 128, 36>}, {pipeline_mode = #tpu.pipeline_mode<synchronous>, transform_indices = @transform_1, window_bounds = array<i64: 36, 128>}, {transform_indices = @transform_2, window_bounds = array<i64: 128, 128>}, {transform_indices = @transform_3, window_bounds = array<i64: 8, 128>}]} {
    %c0 = arith.constant 0 : index
    %c0_0 = arith.constant 0 : index
    %0 = vector.load %arg1[%c0, %c0_0] : memref<128x36xf32, #tpu.memory_space<vmem>>, vector<128x36xf32>
    %c0_1 = arith.constant 0 : index
    %c0_2 = arith.constant 0 : index
    %1 = vector.load %arg2[%c0_1, %c0_2] : memref<36x128xf32, #tpu.memory_space<vmem>>, vector<36x128xf32>
    %cst = arith.constant dense<0.000000e+00> : vector<128x128xf32>
    %2 = tpu.matmul %0, %1, %cst {dimension_numbers = #tpu.dot_dimension_numbers<[1], [0], [0], [1], [0, 0, 1, 1], [], []>} : vector<128x36xf32>, vector<36x128xf32>, vector<128x128xf32> -> vector<128x128xf32>
    %c0_3 = arith.constant 0 : index
    %c0_4 = arith.constant 0 : index
    %3 = vector.load %arg3[%c0_3, %c0_4] : memref<128x128xf32, #tpu.memory_space<vmem>>, vector<128x128xf32>
    tpu.vector_store %arg3[%c0_3, %c0_4], %2 {strides = array<i32>} : memref<128x128xf32, #tpu.memory_space<vmem>>, vector<128x128xf32>,
    %cst_5 = arith.constant dense<0.000000e+00> : vector<128xf32>
    %4 = vector.multi_reduction <add>, %2, %cst_5 [0] : vector<128x128xf32> to vector<128xf32>
    %5 = vector.shape_cast %4 : vector<128xf32> to vector<1x128xf32>
    %6 = arith.mulf %2, %2 : vector<128x128xf32>
    %cst_6 = arith.constant dense<0.000000e+00> : vector<128xf32>
    %7 = vector.multi_reduction <add>, %6, %cst_6 [0] : vector<128x128xf32> to vector<128xf32>
    %8 = vector.shape_cast %7 : vector<128xf32> to vector<1x128xf32>
    %cst_7 = arith.constant 0.000000e+00 : f32
    %9 = vector.broadcast %cst_7 : f32 to vector<6x128xf32>
    %10 = tpu.concatenate %5, %8, %9 in 0 : vector<1x128xf32>, vector<1x128xf32>, vector<6x128xf32> -> vector<8x128xf32>
    %c0_8 = arith.constant 0 : index
    %c0_9 = arith.constant 0 : index
    %11 = vector.load %arg4[%c0_8, %c0_9] : memref<8x128xf32, #tpu.memory_space<vmem>>, vector<8x128xf32>
    tpu.vector_store %arg4[%c0_8, %c0_9], %10 {strides = array<i32>} : memref<8x128xf32, #tpu.memory_space<vmem>>, vector<8x128xf32>,
    return
  }
  func.func @transform_0(%arg0: i32) -> (i32, i32) {
    %c0_i32 = arith.constant 0 : i32
    %c0_i32_0 = arith.constant 0 : i32
    return %arg0, %c0_i32 : i32, i32
  }
  func.func @transform_1(%arg0: i32) -> (i32, i32) {
    %c0_i32 = arith.constant 0 : i32
    %c0_i32_0 = arith.constant 0 : i32
    %c0_i32_1 = arith.constant 0 : i32
    return %c0_i32, %c0_i32_0 : i32, i32
  }
  func.func @transform_2(%arg0: i32) -> (i32, i32) {
    %c0_i32 = arith.constant 0 : i32
    %c0_i32_0 = arith.constant 0 : i32
    return %arg0, %c0_i32 : i32, i32
  }
  func.func @transform_3(%arg0: i32) -> (i32, i32) {
    %c0_i32 = arith.constant 0 : i32
    %c0_i32_0 = arith.constant 0 : i32
    return %arg0, %c0_i32 : i32, i32
  }
}

</mosaic_0001>

<llo_original>
// kernel: tpu_custom_call.1
$region0: #{tpu_custom_call.1}
  #allocation0 [shape = 'u32[]', space=smem, size = 0x4, offset = 0x4, fixed_abs, tag = 'smem constant byte address 0x4 - core index']
  #allocation1 [shape = 'u32[144,128]{1,0:T(1,128)}', space=vmem, size = 0x12000, scoped, tag = 'internal scratch']
  %s0 = inlined_call_operand.vmem [shape: f32[512,36], index: 0, kind: input, shape index: {}]
  %s1 = inlined_call_operand.vmem [shape: f32[36,128], index: 1, kind: input, shape index: {}]
  %s2 = inlined_call_operand.hbm [shape: f32[512,128], index: 2, kind: output, shape index: {0}]
  %s3 = inlined_call_operand.hbm [shape: f32[32,128], index: 3, kind: output, shape index: {1}]
  %4 = xla_tuple %s2, %s3
  %s5 = sld [smem:[#allocation0]]
  $region49: #{tpu_custom_call.1} parent=0
    _
  %s7 = ssub.s32 1, %s5
  %s8 = scalar_select 0, %s7, %s5
  $region1: #{tpu_custom_call.1} parent=0
    #allocation2 [shape = 'u8[131072]{0}', space=vmem, size = 0x20000, scoped, tag = 'output window, operand 0']
    #allocation3 [shape = 's32[2]{0}', space=sflag, size = 0x8, scoped, tag = 'scoped memory for tpu_custom_call.1']
    #allocation4 [shape = 'u8[8192]{0}', space=vmem, size = 0x2000, scoped, tag = 'output window, operand 1']
    #allocation5 [shape = 's32[2]{0}', space=sflag, size = 0x8, scoped, tag = 'scoped memory for tpu_custom_call.1']
    %9 = vsyncpa [#allocation3], 0
    %s10 = scalar_lea.sflag [#allocation3], 1
    %11 = vsyncpa %s10, 0
    %12 = vsyncpa [#allocation5], 0
    %s13 = scalar_lea.sflag [#allocation5], 1
    %14 = vsyncpa %s13, 0
    loop: start=0, step=1, limit=6
    $region2: #{tpu_custom_call.1} parent=1 // loop_pre_header
      _
    $region3: #{tpu_custom_call.1} parent=1 // loop_header
      %s16 = sphi 0, %s20
      %p17 = scmp.ge.s32.totalorder %s16, 6
      %s26 = sphi 0, %s28
      %s29 = sphi 0, %s26
      %s30 = sphi 0, %s29
      %s46 = sphi 0, %s30
      %s50 = sphi 0, %s50
      %s52 = sphi 0, %s50
      %s53 = sphi 0, %s52
      %s67 = sphi 0, %s53
      %s73 = sphi 0, %s75
      %s76 = sphi 0, %s73
      %s77 = sphi 0, %s76
      %s93 = sphi 0, %s77
      %s99 = sphi 0, %s101
      %s102 = sphi 0, %s99
      %s103 = sphi 0, %s102
      %s119 = sphi 0, %s103
    $region4: #{tpu_custom_call.1} parent=1 // loop_header_branch
      %19 = sbr.rel (%p17) target = $region8
    $region5: #{tpu_custom_call.1} parent=1 // loop_body
      %s21 = ssub.s32 %s16, 1
      %s22 = ssub.s32 %s16, 2
      %s23 = sadd.s32 %s16, 1
      %s24 = ssub.s32 %s16, %s23
      %p25 = scmp.eq.s32.totalorder %s24, 0
      %s27 = sadd.s32 %s26, 1
      %s28 = scalar_select %p25, %s26, %s27
      %p31 = pneg %p25
      %p32 = scmp.eq.s32.totalorder %s16, 3
      %p33 = por %p31, %p32
      %p34 = scmp.ne.s32.totalorder %s26, %s29
      %p35 = scmp.eq.s32.totalorder %s16, 0
      %p36 = por %p34, %p35
      %p37 = scmp.ne.s32.totalorder %s26, %s29
      %p38 = scmp.eq.s32.totalorder %s21, 3
      %p39 = por %p37, %p38
      %p40 = scmp.ne.s32.totalorder %s29, %s30
      %p41 = scmp.eq.s32.totalorder %s21, 0
      %p42 = por %p40, %p41
      %p43 = scmp.ne.s32.totalorder %s29, %s30
      %p44 = scmp.eq.s32.totalorder %s22, 3
      %p45 = por %p43, %p44
      %p47 = scmp.ne.s32.totalorder %s30, %s46
      %p48 = scmp.eq.s32.totalorder %s22, 0
      %p49 = por %p47, %p48
      %s51 = sadd.s32 %s50, 1
      %p54 = scmp.eq.s32.totalorder %s16, 3
      %p55 = scmp.ne.s32.totalorder %s50, %s52
      %p56 = scmp.eq.s32.totalorder %s16, 0
      %p57 = por %p55, %p56
      %p58 = scmp.ne.s32.totalorder %s50, %s52
      %p59 = scmp.eq.s32.totalorder %s21, 3
      %p60 = por %p58, %p59
      %p61 = scmp.ne.s32.totalorder %s52, %s53
      %p62 = scmp.eq.s32.totalorder %s21, 0
      %p63 = por %p61, %p62
      %p64 = scmp.ne.s32.totalorder %s52, %s53
      %p65 = scmp.eq.s32.totalorder %s22, 3
      %p66 = por %p64, %p65
      %p68 = scmp.ne.s32.totalorder %s53, %s67
      %p69 = scmp.eq.s32.totalorder %s22, 0
      %p70 = por %p68, %p69
      %s71 = ssub.s32 %s16, %s23
      %p72 = scmp.eq.s32.totalorder %s71, 0
      %s74 = sadd.s32 %s73, 1
      %s75 = scalar_select %p72, %s73, %s74
      %p78 = pneg %p72
      %p79 = scmp.eq.s32.totalorder %s16, 3
      %p80 = por %p78, %p79
      %p81 = scmp.ne.s32.totalorder %s73, %s76
      %p82 = scmp.eq.s32.totalorder %s16, 0
      %p83 = por %p81, %p82
      %p84 = scmp.ne.s32.totalorder %s73, %s76
      %p85 = scmp.eq.s32.totalorder %s21, 3
      %p86 = por %p84, %p85
      %p87 = scmp.ne.s32.totalorder %s76, %s77
      %p88 = scmp.eq.s32.totalorder %s21, 0
      %p89 = por %p87, %p88
      %p90 = scmp.ne.s32.totalorder %s76, %s77
      %p91 = scmp.eq.s32.totalorder %s22, 3
      %p92 = por %p90, %p91
      %p94 = scmp.ne.s32.totalorder %s77, %s93
      %p95 = scmp.eq.s32.totalorder %s22, 0
      %p96 = por %p94, %p95
      %s97 = ssub.s32 %s16, %s23
      %p98 = scmp.eq.s32.totalorder %s97, 0
      %s100 = sadd.s32 %s99, 1
      %s101 = scalar_select %p98, %s99, %s100
      %p104 = pneg %p98
      %p105 = scmp.eq.s32.totalorder %s16, 3
      %p106 = por %p104, %p105
      %p107 = scmp.ne.s32.totalorder %s99, %s102
      %p108 = scmp.eq.s32.totalorder %s16, 0
      %p109 = por %p107, %p108
      %p110 = scmp.ne.s32.totalorder %s99, %s102
      %p111 = scmp.eq.s32.totalorder %s21, 3
      %p112 = por %p110, %p111
      %p113 = scmp.ne.s32.totalorder %s102, %s103
      %p114 = scmp.eq.s32.totalorder %s21, 0
      %p115 = por %p113, %p114
      %p116 = scmp.ne.s32.totalorder %s102, %s103
      %p117 = scmp.eq.s32.totalorder %s22, 3
      %p118 = por %p116, %p117
      %p120 = scmp.ne.s32.totalorder %s103, %s119
      %p121 = scmp.eq.s32.totalorder %s22, 0
      %p122 = por %p120, %p121
      %p123 = scmp.le.s32.totalorder 1, %s16
      %p124 = scmp.lt.s32.totalorder %s16, 5
      %p125 = pnand %p123, %p124
      %p126 = pneg %p125
      // Predicated region
      $region9: #{tpu_custom_call.1} parent=5 // pred_check
        _
      $region10: #{tpu_custom_call.1} parent=5 // pred_check_branch
        %128 = sbr.rel (%p125) target = $region12
      $region11: #{tpu_custom_call.1} parent=5 // pred_region
        %s129 = ssub.s32 %s16, 1
        // Predicated region
        $region13: #{tpu_custom_call.1} parent=11 // pred_check
          %p130 = pneg %p63
        $region14: #{tpu_custom_call.1} parent=11 // pred_check_branch
          %132 = sbr.rel (%p130) target = $region16
        $region15: #{tpu_custom_call.1} parent=11 // pred_region
          _
        $region16: #{tpu_custom_call.1} parent=11 // pred_fallthru
          _
      $region12: #{tpu_custom_call.1} parent=5 // pred_fallthru
        _
      %p133 = scmp.lt.s32.totalorder %s16, 4
      // Predicated region
      $region17: #{tpu_custom_call.1} parent=5 // pred_check
        %p134 = pneg %p133
      $region18: #{tpu_custom_call.1} parent=5 // pred_check_branch
        %136 = sbr.rel (%p134) target = $region20
      $region19: #{tpu_custom_call.1} parent=5 // pred_region
        // Predicated region
        $region21: #{tpu_custom_call.1} parent=19 // pred_check
          %p137 = pneg %p36
        $region22: #{tpu_custom_call.1} parent=19 // pred_check_branch
          %139 = sbr.rel (%p137) target = $region24
        $region23: #{tpu_custom_call.1} parent=19 // pred_region
          %s140 = smul.u32 16, %s16
          %p141 = scmp.lt.s32.totalorder %s140, 63
          %s142 = scalar_select %p141, %s140, 63
          %s143 = smul.addr %s142, 8
          %s144 = scalar_lea.vmem %s0, %s143
          %s145 = smul.u32 16, %s16
        $region24: #{tpu_custom_call.1} parent=19 // pred_fallthru
          _
      $region20: #{tpu_custom_call.1} parent=5 // pred_fallthru
        _
      %p146 = scmp.le.s32.totalorder 1, %s16
      %p147 = scmp.lt.s32.totalorder %s16, 5
      %p148 = pnand %p146, %p147
      %p149 = pneg %p148
      // Predicated region
      $region25: #{tpu_custom_call.1} parent=5 // pred_check
        _
      $region26: #{tpu_custom_call.1} parent=5 // pred_check_branch
        %151 = sbr.rel (%p148) target = $region28
      $region27: #{tpu_custom_call.1} parent=5 // pred_region
        %s152 = ssub.s32 %s16, 1
        %s153 = smul.u32 16, %s21
        %p154 = scmp.lt.s32.totalorder %s153, 63
        %s155 = scalar_select %p154, %s153, 63
        %s156 = smul.addr %s155, 8
        %s157 = scalar_lea.vmem %s0, %s156
        %p158 = pneg %p42
        %p159 = pneg %p39
        %p160 = pneg %p63
        %p161 = pneg %p60
        %p162 = pneg %p89
        %p163 = pneg %p86
        %s164 = sand.u32 %s76, 1
        %s165 = scalar_lea.sflag [#allocation3], %s164
        %s166 = sand.u32 %s76, 1
        %s167 = smul.addr %s166, 128
        %s168 = scalar_lea.vmem [#allocation2], %s167
        %p169 = pneg %p115
        %p170 = pneg %p112
        %s171 = sand.u32 %s102, 1
        %s172 = scalar_lea.sflag [#allocation5], %s171
        %s173 = sand.u32 %s102, 1
        %s174 = smul.addr %s173, 8
        %s175 = scalar_lea.vmem [#allocation4], %s174
        %s176 = smul.u32 16, %s21
        %p177 = scmp.lt.s32.totalorder %s176, 63
        %s178 = scalar_select %p177, %s176, 63
        %s179 = smul.addr %s178, 8
        %s180 = scalar_lea.vmem %s0, %s179
        %s181 = smul.u32 16, %s21
        %s182 = smul.u32 16, %s21
        %v183 = vld [vmem:[%s180] sm:$0xff]
        %v184 = vld [vmem:[%s180 + $0x8] sm:$0xff]
        %v185 = vld [vmem:[%s180 + $0x10] sm:$0xff]
        %v186 = vld [vmem:[%s180 + $0x18] sm:$0xff]
        %v187 = vld [vmem:[%s180 + $0x20] sm:$0xff]
        %v188 = vld [vmem:[%s180 + $0x28] sm:$0xff]
        %v189 = vld [vmem:[%s180 + $0x30] sm:$0xff]
        %v190 = vld [vmem:[%s180 + $0x38] sm:$0xff]
        %v191 = vld [vmem:[%s180 + $0x40] sm:$0xff]
        %v192 = vld [vmem:[%s180 + $0x48] sm:$0xff]
        %v193 = vld [vmem:[%s180 + $0x50] sm:$0xff]
        %v194 = vld [vmem:[%s180 + $0x58] sm:$0xff]
        %v195 = vld [vmem:[%s180 + $0x60] sm:$0xff]
        %v196 = vld [vmem:[%s180 + $0x68] sm:$0xff]
        %v197 = vld [vmem:[%s180 + $0x70] sm:$0xff]
        %v198 = vld [vmem:[%s180 + $0x78] sm:$0xff]
        %v199 = vld [vmem:[%s1] sm:$0xff]
        %v200 = vld [vmem:[%s1 + $0x8] sm:$0xff]
        %v201 = vld [vmem:[%s1 + $0x10] sm:$0xff]
        %v202 = vld [vmem:[%s1 + $0x18] sm:$0xff]
        %v203 = vld [vmem:[%s1 + $0x20] sm:$0xf]
        %vm204 = vcmask 293888
        %v206 = vsel %vm204, %v183, 0
        %v209 = vsel %vm204, %v184, 0
        %v212 = vsel %vm204, %v185, 0
        %v215 = vsel %vm204, %v186, 0
        %v218 = vsel %vm204, %v187, 0
        %v221 = vsel %vm204, %v188, 0
        %v224 = vsel %vm204, %v189, 0
        %v227 = vsel %vm204, %v190, 0
        %v230 = vsel %vm204, %v191, 0
        %v233 = vsel %vm204, %v192, 0
        %v236 = vsel %vm204, %v193, 0
        %v239 = vsel %vm204, %v194, 0
        %v242 = vsel %vm204, %v195, 0
        %v245 = vsel %vm204, %v196, 0
        %v248 = vsel %vm204, %v197, 0
        %v251 = vsel %vm204, %v198, 0
        %vm253 = vcmask 1043456
        %v255 = vsel %vm253, %v203, 0
        %257 = vmatprep.subr.mxu0 0.0
        %258 = vmatpush1.msra.mxu0 %v199
        %259 = vmatprep.subr.mxu0 0.0
        %260 = vmatpush1.msra.mxu0 %v200
        %261 = vmatprep.subr.mxu0 0.0
        %262 = vmatpush1.msra.mxu0 %v201
        %263 = vmatprep.subr.mxu0 0.0
        %264 = vmatpush1.msra.mxu0 %v202
        %265 = vmatprep.subr.mxu0 0.0
        %266 = vmatpush1.msra.mxu0 %v255
        %267 = vmatprep.subr.mxu0 0.0
        %268 = vmatpush1.msra.mxu0 0.0
        %269 = vmatprep.subr.mxu0 0.0
        %270 = vmatpush1.msra.mxu0 0.0
        %271 = vmatprep.subr.mxu0 0.0
        %272 = vmatpush1.msra.mxu0 0.0
        %273 = vmatprep.subr.mxu0 0.0
        %274 = vmatpush1.msra.mxu0 0.0
        %275 = vmatprep.subr.mxu0 0.0
        %276 = vmatpush1.msra.mxu0 0.0
        %277 = vmatprep.subr.mxu0 0.0
        %278 = vmatpush1.msra.mxu0 0.0
        %279 = vmatprep.subr.mxu0 0.0
        %280 = vmatpush1.msra.mxu0 0.0
        %281 = vmatprep.subr.mxu0 0.0
        %282 = vmatpush1.msra.mxu0 0.0
        %283 = vmatprep.subr.mxu0 0.0
        %284 = vmatpush1.msra.mxu0 0.0
        %285 = vmatprep.subr.mxu0 0.0
        %286 = vmatpush1.msra.mxu0 0.0
        %287 = vmatprep.subr.mxu0 0.0
        %288 = vmatpush1.msra.mxu0 0.0
        %289 = vmatprep.subr.mxu0 0.0
        %290 = vmatpush1.msra.mxu0 0.0
        %291 = vmatprep.subr.mxu0 0.0
        %292 = vmatpush1.msra.mxu0 0.0
        %293 = vmatprep.subr.mxu0 0.0
        %294 = vmatpush1.msra.mxu0 0.0
        %295 = vmatprep.subr.mxu0 0.0
        %296 = vmatpush1.msra.mxu0 0.0
        %297 = vmatprep.subr.mxu0 0.0
        %298 = vmatpush1.msra.mxu0 0.0
        %299 = vmatprep.subr.mxu0 0.0
        %300 = vmatpush1.msra.mxu0 0.0
        %301 = vmatprep.subr.mxu0 0.0
        %302 = vmatpush1.msra.mxu0 0.0
        %303 = vmatprep.subr.mxu0 0.0
        %304 = vmatpush1.msra.mxu0 0.0
        %305 = vmatprep.subr.mxu0 0.0
        %306 = vmatpush1.msra.mxu0 0.0
        %307 = vmatprep.subr.mxu0 0.0
        %308 = vmatpush1.msra.mxu0 0.0
        %309 = vmatprep.subr.mxu0 0.0
        %310 = vmatpush1.msra.mxu0 0.0
        %311 = vmatprep.subr.mxu0 0.0
        %312 = vmatpush1.msra.mxu0 0.0
        %313 = vmatprep.subr.mxu0 0.0
        %314 = vmatpush1.msra.mxu0 0.0
        %315 = vmatprep.subr.mxu0 0.0
        %316 = vmatpush1.msra.mxu0 0.0
        %317 = vmatprep.subr.mxu0 0.0
        %318 = vmatpush1.msra.mxu0 0.0
        %319 = vmatprep.subr.mxu0 0.0
        %320 = vmatpush1.msra.mxu0 0.0
        %321 = vmatprep.mubr.f32.mxu0 0.0
        %322 = vmatmul.mubr.f32.gmra.mrb[0].mxu0 %v206
        %v323 = vpop.f32.mrb[0].mxu0
        %v324 = vadd.f32 0.0, %v323
        %v325 = vpop.f32.mrb[0].mxu0
        %326 = vmatprep.mubr.f32.mxu0 0.0
        %327 = vmatmul.mubr.f32.gmra.mrb[0].mxu0 %v209
        %v328 = vpop.f32.mrb[0].mxu0
        %v329 = vadd.f32 0.0, %v328
        %v330 = vpop.f32.mrb[0].mxu0
        %331 = vmatprep.mubr.f32.mxu0 0.0
        %332 = vmatmul.mubr.f32.gmra.mrb[0].mxu0 %v212
        %v333 = vpop.f32.mrb[0].mxu0
        %v334 = vadd.f32 0.0, %v333
        %v335 = vpop.f32.mrb[0].mxu0
        %336 = vmatprep.mubr.f32.mxu0 0.0
        %337 = vmatmul.mubr.f32.gmra.mrb[0].mxu0 %v215
        %v338 = vpop.f32.mrb[0].mxu0
        %v339 = vadd.f32 0.0, %v338
        %v340 = vpop.f32.mrb[0].mxu0
        %341 = vmatprep.mubr.f32.mxu0 0.0
        %342 = vmatmul.mubr.f32.gmra.mrb[0].mxu0 %v218
        %v343 = vpop.f32.mrb[0].mxu0
        %v344 = vadd.f32 0.0, %v343
        %v345 = vpop.f32.mrb[0].mxu0
        %346 = vmatprep.mubr.f32.mxu0 0.0
        %347 = vmatmul.mubr.f32.gmra.mrb[0].mxu0 %v221
        %v348 = vpop.f32.mrb[0].mxu0
        %v349 = vadd.f32 0.0, %v348
        %v350 = vpop.f32.mrb[0].mxu0
        %351 = vmatprep.mubr.f32.mxu0 0.0
        %352 = vmatmul.mubr.f32.gmra.mrb[0].mxu0 %v224
        %v353 = vpop.f32.mrb[0].mxu0
        %v354 = vadd.f32 0.0, %v353
        %v355 = vpop.f32.mrb[0].mxu0
        %356 = vmatprep.mubr.f32.mxu0 0.0
        %357 = vmatmul.mubr.f32.gmra.mrb[0].mxu0 %v227
        %v358 = vpop.f32.mrb[0].mxu0
        %v359 = vadd.f32 0.0, %v358
        %v360 = vpop.f32.mrb[0].mxu0
        %361 = vmatprep.mubr.f32.mxu0 0.0
        %362 = vmatmul.mubr.f32.gmra.mrb[0].mxu0 %v230
        %v363 = vpop.f32.mrb[0].mxu0
        %v364 = vadd.f32 0.0, %v363
        %v365 = vpop.f32.mrb[0].mxu0
        %366 = vmatprep.mubr.f32.mxu0 0.0
        %367 = vmatmul.mubr.f32.gmra.mrb[0].mxu0 %v233
        %v368 = vpop.f32.mrb[0].mxu0
        %v369 = vadd.f32 0.0, %v368
        %v370 = vpop.f32.mrb[0].mxu0
        %371 = vmatprep.mubr.f32.mxu0 0.0
        %372 = vmatmul.mubr.f32.gmra.mrb[0].mxu0 %v236
        %v373 = vpop.f32.mrb[0].mxu0
        %v374 = vadd.f32 0.0, %v373
        %v375 = vpop.f32.mrb[0].mxu0
        %376 = vmatprep.mubr.f32.mxu0 0.0
        %377 = vmatmul.mubr.f32.gmra.mrb[0].mxu0 %v239
        %v378 = vpop.f32.mrb[0].mxu0
        %v379 = vadd.f32 0.0, %v378
        %v380 = vpop.f32.mrb[0].mxu0
        %381 = vmatprep.mubr.f32.mxu0 0.0
        %382 = vmatmul.mubr.f32.gmra.mrb[0].mxu0 %v242
        %v383 = vpop.f32.mrb[0].mxu0
        %v384 = vadd.f32 0.0, %v383
        %v385 = vpop.f32.mrb[0].mxu0
        %386 = vmatprep.mubr.f32.mxu0 0.0
        %387 = vmatmul.mubr.f32.gmra.mrb[0].mxu0 %v245
        %v388 = vpop.f32.mrb[0].mxu0
        %v389 = vadd.f32 0.0, %v388
        %v390 = vpop.f32.mrb[0].mxu0
        %391 = vmatprep.mubr.f32.mxu0 0.0
        %392 = vmatmul.mubr.f32.gmra.mrb[0].mxu0 %v248
        %v393 = vpop.f32.mrb[0].mxu0
        %v394 = vadd.f32 0.0, %v393
        %v395 = vpop.f32.mrb[0].mxu0
        %396 = vmatprep.mubr.f32.mxu0 0.0
        %397 = vmatmul.mubr.f32.gmra.mrb[0].mxu0 %v251
        %v398 = vpop.f32.mrb[0].mxu0
        %v399 = vadd.f32 0.0, %v398
        %v400 = vpop.f32.mrb[0].mxu0
        %401 = vdwg.mxu0
        %402 = vst [vmem:[%s168] sm:$0xff] %v324
        %403 = vst [vmem:[%s168 + $0x8] sm:$0xff] %v329
        %404 = vst [vmem:[%s168 + $0x10] sm:$0xff] %v334
        %405 = vst [vmem:[%s168 + $0x18] sm:$0xff] %v339
        %406 = vst [vmem:[%s168 + $0x20] sm:$0xff] %v344
        %407 = vst [vmem:[%s168 + $0x28] sm:$0xff] %v349
        %408 = vst [vmem:[%s168 + $0x30] sm:$0xff] %v354
        %409 = vst [vmem:[%s168 + $0x38] sm:$0xff] %v359
        %410 = vst [vmem:[%s168 + $0x40] sm:$0xff] %v364
        %411 = vst [vmem:[%s168 + $0x48] sm:$0xff] %v369
        %412 = vst [vmem:[%s168 + $0x50] sm:$0xff] %v374
        %413 = vst [vmem:[%s168 + $0x58] sm:$0xff] %v379
        %414 = vst [vmem:[%s168 + $0x60] sm:$0xff] %v384
        %415 = vst [vmem:[%s168 + $0x68] sm:$0xff] %v389
        %416 = vst [vmem:[%s168 + $0x70] sm:$0xff] %v394
        %417 = vst [vmem:[%s168 + $0x78] sm:$0xff] %v399
        %v418 = vadd.f32 %v324, %v329
        %v419 = vadd.f32 %v418, %v334
        %v420 = vadd.f32 %v419, %v339
        %v421 = vadd.f32 %v420, %v344
        %v422 = vadd.f32 %v421, %v349
        %v423 = vadd.f32 %v422, %v354
        %v424 = vadd.f32 %v423, %v359
        %v425 = vadd.f32 %v424, %v364
        %v426 = vadd.f32 %v425, %v369
        %v427 = vadd.f32 %v426, %v374
        %v428 = vadd.f32 %v427, %v379
        %v429 = vadd.f32 %v428, %v384
        %v430 = vadd.f32 %v429, %v389
        %v431 = vadd.f32 %v430, %v394
        %v432 = vadd.f32 %v431, %v399
        %v433 = vrot.slane %v432, 4
        %v434 = vadd.f32 %v432, %v433
        %v435 = vrot.slane %v434, 2
        %v436 = vadd.f32 %v434, %v435
        %v437 = vrot.slane %v436, 1
        %v438 = vadd.f32 %v436, %v437
        %v439 = vmul.f32 %v324, %v324
        %v440 = vmul.f32 %v329, %v329
        %v441 = vmul.f32 %v334, %v334
        %v442 = vmul.f32 %v339, %v339
        %v443 = vmul.f32 %v344, %v344
        %v444 = vmul.f32 %v349, %v349
        %v445 = vmul.f32 %v354, %v354
        %v446 = vmul.f32 %v359, %v359
        %v447 = vmul.f32 %v364, %v364
        %v448 = vmul.f32 %v369, %v369
        %v449 = vmul.f32 %v374, %v374
        %v450 = vmul.f32 %v379, %v379
        %v451 = vmul.f32 %v384, %v384
        %v452 = vmul.f32 %v389, %v389
        %v453 = vmul.f32 %v394, %v394
        %v454 = vmul.f32 %v399, %v399
        %v455 = vadd.f32 %v439, %v440
        %v456 = vadd.f32 %v455, %v441
        %v457 = vadd.f32 %v456, %v442
        %v458 = vadd.f32 %v457, %v443
        %v459 = vadd.f32 %v458, %v444
        %v460 = vadd.f32 %v459, %v445
        %v461 = vadd.f32 %v460, %v446
        %v462 = vadd.f32 %v461, %v447
        %v463 = vadd.f32 %v462, %v448
        %v464 = vadd.f32 %v463, %v449
        %v465 = vadd.f32 %v464, %v450
        %v466 = vadd.f32 %v465, %v451
        %v467 = vadd.f32 %v466, %v452
        %v468 = vadd.f32 %v467, %v453
        %v469 = vadd.f32 %v468, %v454
        %v470 = vrot.slane %v469, 4
        %v471 = vadd.f32 %v469, %v470
        %v472 = vrot.slane %v471, 2
        %v473 = vadd.f32 %v471, %v472
        %v474 = vrot.slane %v473, 1
        %v475 = vadd.f32 %v473, %v474
        %vm476 = vcmask 1040384
        %v477 = vsel %vm476, %v438, %v475
        %vm478 = vcmask 1041408
        %v479 = vsel %vm478, %v477, 0.0
        %480 = vst [vmem:[%s175] sm:$0xff] %v479
        %s481 = sand.u32 %s76, 1
        %s482 = scalar_lea.sflag [#allocation3], %s481
        %s483 = sand.u32 %s76, 1
        %s484 = smul.addr %s483, 128
        %s485 = scalar_lea.vmem [#allocation2], %s484
        %s486 = sand.u32 %s102, 1
        %s487 = scalar_lea.sflag [#allocation5], %s486
        %s488 = sand.u32 %s102, 1
        %s489 = smul.addr %s488, 8
        %s490 = scalar_lea.vmem [#allocation4], %s489
        // Predicated region
        $region29: #{tpu_custom_call.1} parent=27 // pred_check
          %p491 = pneg %p86
        $region30: #{tpu_custom_call.1} parent=27 // pred_check_branch
          %493 = sbr.rel (%p491) target = $region32
        $region31: #{tpu_custom_call.1} parent=27 // pred_region
          %s494 = smul.u32 16, %s21
          %s496 = ssub.s32 2048, 2048
          %497 = vsyncadd %s482, %s496
          %s498 = smul.addr %s494, 128
          %s499 = scalar_lea.hbm %s2, %s498
          %s500 = sshll.u32 %s485, 4
          %s501 = int_to_ptr.vmem [resolvable:$true] %s500
          %506 = dma.vmem_to_hbm [thread:$0]  %s501, 2048, %s499, %s482, 128, 128, 8
        $region32: #{tpu_custom_call.1} parent=27 // pred_fallthru
          _
        // Predicated region
        $region33: #{tpu_custom_call.1} parent=27 // pred_check
          %p507 = pneg %p112
        $region34: #{tpu_custom_call.1} parent=27 // pred_check_branch
          %509 = sbr.rel (%p507) target = $region36
        $region35: #{tpu_custom_call.1} parent=27 // pred_region
          %s511 = ssub.s32 128, 128
          %512 = vsyncadd %s487, %s511
          %s513 = smul.addr %s21, 128
          %s514 = scalar_lea.hbm %s3, %s513
          %s516 = sshll.u32 %s490, 4
          %s517 = int_to_ptr.vmem [resolvable:$true] %s516
          %519 = dma.vmem_to_hbm [thread:$0]  %s517, 128, %s514, %s487
        $region36: #{tpu_custom_call.1} parent=27 // pred_fallthru
          _
      $region28: #{tpu_custom_call.1} parent=5 // pred_fallthru
        _
      %p520 = scmp.le.s32.totalorder 2, %s16
      // Predicated region
      $region37: #{tpu_custom_call.1} parent=5 // pred_check
        %p521 = pneg %p520
      $region38: #{tpu_custom_call.1} parent=5 // pred_check_branch
        %523 = sbr.rel (%p521) target = $region40
      $region39: #{tpu_custom_call.1} parent=5 // pred_region
        %s524 = ssub.s32 %s16, 2
        // Predicated region
        $region41: #{tpu_custom_call.1} parent=39 // pred_check
          %p525 = pneg %p92
        $region42: #{tpu_custom_call.1} parent=39 // pred_check_branch
          %527 = sbr.rel (%p525) target = $region44
        $region43: #{tpu_custom_call.1} parent=39 // pred_region
          %s528 = sand.u32 %s77, 1
          %s529 = scalar_lea.sflag [#allocation3], %s528
          %s530 = sand.u32 %s77, 1
          %s531 = smul.addr %s530, 128
          %s532 = scalar_lea.vmem [#allocation2], %s531
          %533 = dma.done %s529, 2048
        $region44: #{tpu_custom_call.1} parent=39 // pred_fallthru
          _
        // Predicated region
        $region45: #{tpu_custom_call.1} parent=39 // pred_check
          %p534 = pneg %p118
        $region46: #{tpu_custom_call.1} parent=39 // pred_check_branch
          %536 = sbr.rel (%p534) target = $region48
        $region47: #{tpu_custom_call.1} parent=39 // pred_region
          %s537 = sand.u32 %s103, 1
          %s538 = scalar_lea.sflag [#allocation5], %s537
          %s539 = sand.u32 %s103, 1
          %s540 = smul.addr %s539, 8
          %s541 = scalar_lea.vmem [#allocation4], %s540
          %542 = dma.done %s538, 128
        $region48: #{tpu_custom_call.1} parent=39 // pred_fallthru
          _
      $region40: #{tpu_custom_call.1} parent=5 // pred_fallthru
        _
    $region6: #{tpu_custom_call.1} parent=1 // loop_footer
      %s20 = sadd.s32 1, %s16
    $region7: #{tpu_custom_call.1} parent=1 // loop_footer_branch
      %15 = sbr.rel target = $region3
    $region8: #{tpu_custom_call.1} parent=1 // loop_exit
      _
    %543 = vsyncpa [#allocation3], 1
    %s544 = scalar_lea.sflag [#allocation3], 1
    %545 = vsyncpa %s544, 1
    %546 = vsyncpa [#allocation5], 1
    %s547 = scalar_lea.sflag [#allocation5], 1
    %548 = vsyncpa %s547, 1

</llo_original>
